<compile_context>
chip_gen: v5e
topology: v5e:2x2
jax: 0.10.0
libtpu: 0.0.40
codegen_flags: <defaults>
</compile_context>

<pallas_src>
import functools

import jax
import jax.numpy as jnp
from jax.experimental import pallas as pl
from jax.experimental.pallas import tpu as pltpu

LANES = 128


def mlp_kernel(w1_ref, b1_ref, w2_ref, b2_ref, x_ref, o_ref, *, hid):
    # x_ref: (block_rows, 128) f32 tile with the batch laid out on lanes.
    x = x_ref[...]
    acc = jnp.zeros(x.shape, dtype=jnp.float32)
    # Statically unrolled 20-term weighted sum of ReLU features (pure VPU).
    for h in range(hid):
        acc = acc + jnp.maximum(x * w1_ref[h] + b1_ref[h], 0.0) * w2_ref[h]
    acc = acc + b2_ref[0]
    o_ref[...] = acc.astype(o_ref.dtype)


@functools.partial(jax.jit, static_argnames=("max_block_rows",))
def net_forward(x, w1, b1, w2, b2, *, max_block_rows=1024):
    """x: (N, 1) f32.  w1,b1,w2: (20,) f32.  b2: (1,) f32.  Returns (N, 1)."""
    n = x.shape[0]
    hid = w1.shape[0]

    # Lane-dense re-layout: flatten the batch and pad to a whole number of
    # (block_rows, 128) blocks.
    rows = pl.cdiv(n, LANES)
    block_rows = min(max_block_rows, ((rows + 7) // 8) * 8)   # multiple of 8 sublanes
    rows_padded = ((rows + block_rows - 1) // block_rows) * block_rows
    n_padded = rows_padded * LANES

    x_flat = jnp.pad(jnp.ravel(x), (0, n_padded - n))
    x2d = x_flat.reshape(rows_padded, LANES)

    grid = (rows_padded // block_rows,)

    out2d = pl.pallas_call(
        functools.partial(mlp_kernel, hid=hid),
        out_shape=jax.ShapeDtypeStruct((rows_padded, LANES), x.dtype),
        grid_spec=pltpu.PrefetchScalarGridSpec(
            num_scalar_prefetch=4,                     # w1, b1, w2, b2 -> SMEM
            grid=grid,
            in_specs=[
                pl.BlockSpec((block_rows, LANES), lambda i, *_: (i, 0)),  # x tile
            ],
            out_specs=pl.BlockSpec((block_rows, LANES), lambda i, *_: (i, 0)),
        ),
        compiler_params=pltpu.CompilerParams(
            dimension_semantics=("parallel",)),
    )(w1, b1, w2, b2, x2d)

    return out2d.reshape(n_padded, 1)[:n]


def init_params(key):
    """PyTorch Linear default init: U(-1/sqrt(fan_in), +1/sqrt(fan_in))."""
    k1, k2, k3, k4 = jax.random.split(key, 4)
    in_dim, hid, out_dim = 1, 20, 1
    bound1 = 1.0 / jnp.sqrt(in_dim)
    bound2 = 1.0 / jnp.sqrt(hid)
    # Stored flat: layer 1 has in_features=1, layer 2 has out_features=1.
    w1 = jax.random.uniform(k1, (hid,), jnp.float32, -bound1, bound1)
    b1 = jax.random.uniform(k2, (hid,), jnp.float32, -bound1, bound1)
    w2 = jax.random.uniform(k3, (hid,), jnp.float32, -bound2, bound2)
    b2 = jax.random.uniform(k4, (out_dim,), jnp.float32, -bound2, bound2)
    return w1, b1, w2, b2


def net_forward_ref(x, w1, b1, w2, b2):
    h = jnp.maximum(x * w1[None, :] + b1[None, :], 0.0)   # (N, 20)
    return h @ w2[:, None] + b2[None, :]                   # (N, 1)


if __name__ == "__main__":
    key = jax.random.PRNGKey(0)
    w1, b1, w2, b2 = init_params(key)

    # Same input as the spec: torch.unsqueeze(torch.linspace(-1, 1, 1000), 1)
    N = 1000
    x = jnp.linspace(-1.0, 1.0, N, dtype=jnp.float32).reshape(N, 1)

    out = net_forward(x, w1, b1, w2, b2)
    out = jax.block_until_ready(out)

    ref = net_forward_ref(x, w1, b1, w2, b2)
    assert out.shape == (N, 1)
    assert jnp.allclose(out, ref, atol=1e-5, rtol=1e-5), "mismatch vs reference"

    print("KERNEL_OK")
</pallas_src>

<mosaic_0001>
module attributes {stable_mosaic.version = 11 : i64} {
  func.func @mlp_kernel(%arg0: i32, %arg1: memref<20xf32, #tpu.memory_space<smem>>, %arg2: memref<20xf32, #tpu.memory_space<smem>>, %arg3: memref<20xf32, #tpu.memory_space<smem>>, %arg4: memref<1xf32, #tpu.memory_space<smem>>, %arg5: memref<8x128xf32, #tpu.memory_space<vmem>>, %arg6: memref<8x128xf32, #tpu.memory_space<vmem>>) attributes {dimension_semantics = [#tpu.dimension_semantics<parallel>], iteration_bounds = array<i64: 1>, scalar_prefetch = 4 : i64, scratch_operands = 0 : i64, tpu.core_type = #tpu.core_type<tc>, window_params = [{transform_indices = @transform_0, window_bounds = array<i64: 8, 128>}, {transform_indices = @transform_1, window_bounds = array<i64: 8, 128>}]} {
    %c0 = arith.constant 0 : index
    %c0_0 = arith.constant 0 : index
    %0 = vector.load %arg5[%c0, %c0_0] : memref<8x128xf32, #tpu.memory_space<vmem>>, vector<8x128xf32>
    %cst = arith.constant 0.000000e+00 : f32
    %1 = vector.broadcast %cst : f32 to vector<8x128xf32>
    %c0_1 = arith.constant 0 : index
    %2 = memref.load %arg1[%c0_1] : memref<20xf32, #tpu.memory_space<smem>>
    %3 = vector.broadcast %2 : f32 to vector<8x128xf32>
    %4 = arith.mulf %0, %3 : vector<8x128xf32>
    %c0_2 = arith.constant 0 : index
    %5 = memref.load %arg2[%c0_2] : memref<20xf32, #tpu.memory_space<smem>>
    %6 = vector.broadcast %5 : f32 to vector<8x128xf32>
    %7 = arith.addf %4, %6 : vector<8x128xf32>
    %cst_3 = arith.constant 0.000000e+00 : f32
    %8 = vector.broadcast %cst_3 : f32 to vector<8x128xf32>
    %9 = arith.maximumf %7, %8 : vector<8x128xf32>
    %c0_4 = arith.constant 0 : index
    %10 = memref.load %arg3[%c0_4] : memref<20xf32, #tpu.memory_space<smem>>
    %11 = vector.broadcast %10 : f32 to vector<8x128xf32>
    %12 = arith.mulf %9, %11 : vector<8x128xf32>
    %13 = arith.addf %1, %12 : vector<8x128xf32>
    %c1 = arith.constant 1 : index
    %14 = memref.load %arg1[%c1] : memref<20xf32, #tpu.memory_space<smem>>
    %15 = vector.broadcast %14 : f32 to vector<8x128xf32>
    %16 = arith.mulf %0, %15 : vector<8x128xf32>
    %c1_5 = arith.constant 1 : index
    %17 = memref.load %arg2[%c1_5] : memref<20xf32, #tpu.memory_space<smem>>
    %18 = vector.broadcast %17 : f32 to vector<8x128xf32>
    %19 = arith.addf %16, %18 : vector<8x128xf32>
    %cst_6 = arith.constant 0.000000e+00 : f32
    %20 = vector.broadcast %cst_6 : f32 to vector<8x128xf32>
    %21 = arith.maximumf %19, %20 : vector<8x128xf32>
    %c1_7 = arith.constant 1 : index
    %22 = memref.load %arg3[%c1_7] : memref<20xf32, #tpu.memory_space<smem>>
    %23 = vector.broadcast %22 : f32 to vector<8x128xf32>
    %24 = arith.mulf %21, %23 : vector<8x128xf32>
    %25 = arith.addf %13, %24 : vector<8x128xf32>
    %c2 = arith.constant 2 : index
    %26 = memref.load %arg1[%c2] : memref<20xf32, #tpu.memory_space<smem>>
    %27 = vector.broadcast %26 : f32 to vector<8x128xf32>
    %28 = arith.mulf %0, %27 : vector<8x128xf32>
    %c2_8 = arith.constant 2 : index
    %29 = memref.load %arg2[%c2_8] : memref<20xf32, #tpu.memory_space<smem>>
    %30 = vector.broadcast %29 : f32 to vector<8x128xf32>
    %31 = arith.addf %28, %30 : vector<8x128xf32>
    %cst_9 = arith.constant 0.000000e+00 : f32
    %32 = vector.broadcast %cst_9 : f32 to vector<8x128xf32>
    %33 = arith.maximumf %31, %32 : vector<8x128xf32>
    %c2_10 = arith.constant 2 : index
    %34 = memref.load %arg3[%c2_10] : memref<20xf32, #tpu.memory_space<smem>>
    %35 = vector.broadcast %34 : f32 to vector<8x128xf32>
    %36 = arith.mulf %33, %35 : vector<8x128xf32>
    %37 = arith.addf %25, %36 : vector<8x128xf32>
    %c3 = arith.constant 3 : index
    %38 = memref.load %arg1[%c3] : memref<20xf32, #tpu.memory_space<smem>>
    %39 = vector.broadcast %38 : f32 to vector<8x128xf32>
    %40 = arith.mulf %0, %39 : vector<8x128xf32>
    %c3_11 = arith.constant 3 : index
    %41 = memref.load %arg2[%c3_11] : memref<20xf32, #tpu.memory_space<smem>>
    %42 = vector.broadcast %41 : f32 to vector<8x128xf32>
    %43 = arith.addf %40, %42 : vector<8x128xf32>
    %cst_12 = arith.constant 0.000000e+00 : f32
    %44 = vector.broadcast %cst_12 : f32 to vector<8x128xf32>
    %45 = arith.maximumf %43, %44 : vector<8x128xf32>
    %c3_13 = arith.constant 3 : index
    %46 = memref.load %arg3[%c3_13] : memref<20xf32, #tpu.memory_space<smem>>
    %47 = vector.broadcast %46 : f32 to vector<8x128xf32>
    %48 = arith.mulf %45, %47 : vector<8x128xf32>
    %49 = arith.addf %37, %48 : vector<8x128xf32>
    %c4 = arith.constant 4 : index
    %50 = memref.load %arg1[%c4] : memref<20xf32, #tpu.memory_space<smem>>
    %51 = vector.broadcast %50 : f32 to vector<8x128xf32>
    %52 = arith.mulf %0, %51 : vector<8x128xf32>
    %c4_14 = arith.constant 4 : index
    %53 = memref.load %arg2[%c4_14] : memref<20xf32, #tpu.memory_space<smem>>
    %54 = vector.broadcast %53 : f32 to vector<8x128xf32>
    %55 = arith.addf %52, %54 : vector<8x128xf32>
    %cst_15 = arith.constant 0.000000e+00 : f32
    %56 = vector.broadcast %cst_15 : f32 to vector<8x128xf32>
    %57 = arith.maximumf %55, %56 : vector<8x128xf32>
    %c4_16 = arith.constant 4 : index
    %58 = memref.load %arg3[%c4_16] : memref<20xf32, #tpu.memory_space<smem>>
    %59 = vector.broadcast %58 : f32 to vector<8x128xf32>
    %60 = arith.mulf %57, %59 : vector<8x128xf32>
    %61 = arith.addf %49, %60 : vector<8x128xf32>
    %c5 = arith.constant 5 : index
    %62 = memref.load %arg1[%c5] : memref<20xf32, #tpu.memory_space<smem>>
    %63 = vector.broadcast %62 : f32 to vector<8x128xf32>
    %64 = arith.mulf %0, %63 : vector<8x128xf32>
    %c5_17 = arith.constant 5 : index
    %65 = memref.load %arg2[%c5_17] : memref<20xf32, #tpu.memory_space<smem>>
    %66 = vector.broadcast %65 : f32 to vector<8x128xf32>
    %67 = arith.addf %64, %66 : vector<8x128xf32>
    %cst_18 = arith.constant 0.000000e+00 : f32
    %68 = vector.broadcast %cst_18 : f32 to vector<8x128xf32>
    %69 = arith.maximumf %67, %68 : vector<8x128xf32>
    %c5_19 = arith.constant 5 : index
    %70 = memref.load %arg3[%c5_19] : memref<20xf32, #tpu.memory_space<smem>>
    %71 = vector.broadcast %70 : f32 to vector<8x128xf32>
    %72 = arith.mulf %69, %71 : vector<8x128xf32>
    %73 = arith.addf %61, %72 : vector<8x128xf32>
    %c6 = arith.constant 6 : index
    %74 = memref.load %arg1[%c6] : memref<20xf32, #tpu.memory_space<smem>>
    %75 = vector.broadcast %74 : f32 to vector<8x128xf32>
    %76 = arith.mulf %0, %75 : vector<8x128xf32>
    %c6_20 = arith.constant 6 : index
    %77 = memref.load %arg2[%c6_20] : memref<20xf32, #tpu.memory_space<smem>>
    %78 = vector.broadcast %77 : f32 to vector<8x128xf32>
    %79 = arith.addf %76, %78 : vector<8x128xf32>
    %cst_21 = arith.constant 0.000000e+00 : f32
    %80 = vector.broadcast %cst_21 : f32 to vector<8x128xf32>
    %81 = arith.maximumf %79, %80 : vector<8x128xf32>
    %c6_22 = arith.constant 6 : index
    %82 = memref.load %arg3[%c6_22] : memref<20xf32, #tpu.memory_space<smem>>
    %83 = vector.broadcast %82 : f32 to vector<8x128xf32>
    %84 = arith.mulf %81, %83 : vector<8x128xf32>
    %85 = arith.addf %73, %84 : vector<8x128xf32>
    %c7 = arith.constant 7 : index
    %86 = memref.load %arg1[%c7] : memref<20xf32, #tpu.memory_space<smem>>
    %87 = vector.broadcast %86 : f32 to vector<8x128xf32>
    %88 = arith.mulf %0, %87 : vector<8x128xf32>
    %c7_23 = arith.constant 7 : index
    %89 = memref.load %arg2[%c7_23] : memref<20xf32, #tpu.memory_space<smem>>
    %90 = vector.broadcast %89 : f32 to vector<8x128xf32>
    %91 = arith.addf %88, %90 : vector<8x128xf32>
    %cst_24 = arith.constant 0.000000e+00 : f32
    %92 = vector.broadcast %cst_24 : f32 to vector<8x128xf32>
    %93 = arith.maximumf %91, %92 : vector<8x128xf32>
    %c7_25 = arith.constant 7 : index
    %94 = memref.load %arg3[%c7_25] : memref<20xf32, #tpu.memory_space<smem>>
    %95 = vector.broadcast %94 : f32 to vector<8x128xf32>
    %96 = arith.mulf %93, %95 : vector<8x128xf32>
    %97 = arith.addf %85, %96 : vector<8x128xf32>
    %c8 = arith.constant 8 : index
    %98 = memref.load %arg1[%c8] : memref<20xf32, #tpu.memory_space<smem>>
    %99 = vector.broadcast %98 : f32 to vector<8x128xf32>
    %100 = arith.mulf %0, %99 : vector<8x128xf32>
    %c8_26 = arith.constant 8 : index
    %101 = memref.load %arg2[%c8_26] : memref<20xf32, #tpu.memory_space<smem>>
    %102 = vector.broadcast %101 : f32 to vector<8x128xf32>
    %103 = arith.addf %100, %102 : vector<8x128xf32>
    %cst_27 = arith.constant 0.000000e+00 : f32
    %104 = vector.broadcast %cst_27 : f32 to vector<8x128xf32>
    %105 = arith.maximumf %103, %104 : vector<8x128xf32>
    %c8_28 = arith.constant 8 : index
    %106 = memref.load %arg3[%c8_28] : memref<20xf32, #tpu.memory_space<smem>>
    %107 = vector.broadcast %106 : f32 to vector<8x128xf32>
    %108 = arith.mulf %105, %107 : vector<8x128xf32>
    %109 = arith.addf %97, %108 : vector<8x128xf32>
    %c9 = arith.constant 9 : index
    %110 = memref.load %arg1[%c9] : memref<20xf32, #tpu.memory_space<smem>>
    %111 = vector.broadcast %110 : f32 to vector<8x128xf32>
    %112 = arith.mulf %0, %111 : vector<8x128xf32>
    %c9_29 = arith.constant 9 : index
    %113 = memref.load %arg2[%c9_29] : memref<20xf32, #tpu.memory_space<smem>>
    %114 = vector.broadcast %113 : f32 to vector<8x128xf32>
    %115 = arith.addf %112, %114 : vector<8x128xf32>
    %cst_30 = arith.constant 0.000000e+00 : f32
    %116 = vector.broadcast %cst_30 : f32 to vector<8x128xf32>
    %117 = arith.maximumf %115, %116 : vector<8x128xf32>
    %c9_31 = arith.constant 9 : index
    %118 = memref.load %arg3[%c9_31] : memref<20xf32, #tpu.memory_space<smem>>
    %119 = vector.broadcast %118 : f32 to vector<8x128xf32>
    %120 = arith.mulf %117, %119 : vector<8x128xf32>
    %121 = arith.addf %109, %120 : vector<8x128xf32>
    %c10 = arith.constant 10 : index
    %122 = memref.load %arg1[%c10] : memref<20xf32, #tpu.memory_space<smem>>
    %123 = vector.broadcast %122 : f32 to vector<8x128xf32>
    %124 = arith.mulf %0, %123 : vector<8x128xf32>
    %c10_32 = arith.constant 10 : index
    %125 = memref.load %arg2[%c10_32] : memref<20xf32, #tpu.memory_space<smem>>
    %126 = vector.broadcast %125 : f32 to vector<8x128xf32>
    %127 = arith.addf %124, %126 : vector<8x128xf32>
    %cst_33 = arith.constant 0.000000e+00 : f32
    %128 = vector.broadcast %cst_33 : f32 to vector<8x128xf32>
    %129 = arith.maximumf %127, %128 : vector<8x128xf32>
    %c10_34 = arith.constant 10 : index
    %130 = memref.load %arg3[%c10_34] : memref<20xf32, #tpu.memory_space<smem>>
    %131 = vector.broadcast %130 : f32 to vector<8x128xf32>
    %132 = arith.mulf %129, %131 : vector<8x128xf32>
    %133 = arith.addf %121, %132 : vector<8x128xf32>
    %c11 = arith.constant 11 : index
    %134 = memref.load %arg1[%c11] : memref<20xf32, #tpu.memory_space<smem>>
    %135 = vector.broadcast %134 : f32 to vector<8x128xf32>
    %136 = arith.mulf %0, %135 : vector<8x128xf32>
    %c11_35 = arith.constant 11 : index
    %137 = memref.load %arg2[%c11_35] : memref<20xf32, #tpu.memory_space<smem>>
    %138 = vector.broadcast %137 : f32 to vector<8x128xf32>
    %139 = arith.addf %136, %138 : vector<8x128xf32>
    %cst_36 = arith.constant 0.000000e+00 : f32
    %140 = vector.broadcast %cst_36 : f32 to vector<8x128xf32>
    %141 = arith.maximumf %139, %140 : vector<8x128xf32>
    %c11_37 = arith.constant 11 : index
    %142 = memref.load %arg3[%c11_37] : memref<20xf32, #tpu.memory_space<smem>>
    %143 = vector.broadcast %142 : f32 to vector<8x128xf32>
    %144 = arith.mulf %141, %143 : vector<8x128xf32>
    %145 = arith.addf %133, %144 : vector<8x128xf32>
    %c12 = arith.constant 12 : index
    %146 = memref.load %arg1[%c12] : memref<20xf32, #tpu.memory_space<smem>>
    %147 = vector.broadcast %146 : f32 to vector<8x128xf32>
    %148 = arith.mulf %0, %147 : vector<8x128xf32>
    %c12_38 = arith.constant 12 : index
    %149 = memref.load %arg2[%c12_38] : memref<20xf32, #tpu.memory_space<smem>>
    %150 = vector.broadcast %149 : f32 to vector<8x128xf32>
    %151 = arith.addf %148, %150 : vector<8x128xf32>
    %cst_39 = arith.constant 0.000000e+00 : f32
    %152 = vector.broadcast %cst_39 : f32 to vector<8x128xf32>
    %153 = arith.maximumf %151, %152 : vector<8x128xf32>
    %c12_40 = arith.constant 12 : index
    %154 = memref.load %arg3[%c12_40] : memref<20xf32, #tpu.memory_space<smem>>
    %155 = vector.broadcast %154 : f32 to vector<8x128xf32>
    %156 = arith.mulf %153, %155 : vector<8x128xf32>
    %157 = arith.addf %145, %156 : vector<8x128xf32>
    %c13 = arith.constant 13 : index
    %158 = memref.load %arg1[%c13] : memref<20xf32, #tpu.memory_space<smem>>
    %159 = vector.broadcast %158 : f32 to vector<8x128xf32>
    %160 = arith.mulf %0, %159 : vector<8x128xf32>
    %c13_41 = arith.constant 13 : index
    %161 = memref.load %arg2[%c13_41] : memref<20xf32, #tpu.memory_space<smem>>
    %162 = vector.broadcast %161 : f32 to vector<8x128xf32>
    %163 = arith.addf %160, %162 : vector<8x128xf32>
    %cst_42 = arith.constant 0.000000e+00 : f32
    %164 = vector.broadcast %cst_42 : f32 to vector<8x128xf32>
    %165 = arith.maximumf %163, %164 : vector<8x128xf32>
    %c13_43 = arith.constant 13 : index
    %166 = memref.load %arg3[%c13_43] : memref<20xf32, #tpu.memory_space<smem>>
    %167 = vector.broadcast %166 : f32 to vector<8x128xf32>
    %168 = arith.mulf %165, %167 : vector<8x128xf32>
    %169 = arith.addf %157, %168 : vector<8x128xf32>
    %c14 = arith.constant 14 : index
    %170 = memref.load %arg1[%c14] : memref<20xf32, #tpu.memory_space<smem>>
    %171 = vector.broadcast %170 : f32 to vector<8x128xf32>
    %172 = arith.mulf %0, %171 : vector<8x128xf32>
    %c14_44 = arith.constant 14 : index
    %173 = memref.load %arg2[%c14_44] : memref<20xf32, #tpu.memory_space<smem>>
    %174 = vector.broadcast %173 : f32 to vector<8x128xf32>
    %175 = arith.addf %172, %174 : vector<8x128xf32>
    %cst_45 = arith.constant 0.000000e+00 : f32
    %176 = vector.broadcast %cst_45 : f32 to vector<8x128xf32>
    %177 = arith.maximumf %175, %176 : vector<8x128xf32>
    %c14_46 = arith.constant 14 : index
    %178 = memref.load %arg3[%c14_46] : memref<20xf32, #tpu.memory_space<smem>>
    %179 = vector.broadcast %178 : f32 to vector<8x128xf32>
    %180 = arith.mulf %177, %179 : vector<8x128xf32>
    %181 = arith.addf %169, %180 : vector<8x128xf32>
    %c15 = arith.constant 15 : index
    %182 = memref.load %arg1[%c15] : memref<20xf32, #tpu.memory_space<smem>>
    %183 = vector.broadcast %182 : f32 to vector<8x128xf32>
    %184 = arith.mulf %0, %183 : vector<8x128xf32>
    %c15_47 = arith.constant 15 : index
    %185 = memref.load %arg2[%c15_47] : memref<20xf32, #tpu.memory_space<smem>>
    %186 = vector.broadcast %185 : f32 to vector<8x128xf32>
    %187 = arith.addf %184, %186 : vector<8x128xf32>
    %cst_48 = arith.constant 0.000000e+00 : f32
    %188 = vector.broadcast %cst_48 : f32 to vector<8x128xf32>
    %189 = arith.maximumf %187, %188 : vector<8x128xf32>
    %c15_49 = arith.constant 15 : index
    %190 = memref.load %arg3[%c15_49] : memref<20xf32, #tpu.memory_space<smem>>
    %191 = vector.broadcast %190 : f32 to vector<8x128xf32>
    %192 = arith.mulf %189, %191 : vector<8x128xf32>
    %193 = arith.addf %181, %192 : vector<8x128xf32>
    %c16 = arith.constant 16 : index
    %194 = memref.load %arg1[%c16] : memref<20xf32, #tpu.memory_space<smem>>
    %195 = vector.broadcast %194 : f32 to vector<8x128xf32>
    %196 = arith.mulf %0, %195 : vector<8x128xf32>
    %c16_50 = arith.constant 16 : index
    %197 = memref.load %arg2[%c16_50] : memref<20xf32, #tpu.memory_space<smem>>
    %198 = vector.broadcast %197 : f32 to vector<8x128xf32>
    %199 = arith.addf %196, %198 : vector<8x128xf32>
    %cst_51 = arith.constant 0.000000e+00 : f32
    %200 = vector.broadcast %cst_51 : f32 to vector<8x128xf32>
    %201 = arith.maximumf %199, %200 : vector<8x128xf32>
    %c16_52 = arith.constant 16 : index
    %202 = memref.load %arg3[%c16_52] : memref<20xf32, #tpu.memory_space<smem>>
    %203 = vector.broadcast %202 : f32 to vector<8x128xf32>
    %204 = arith.mulf %201, %203 : vector<8x128xf32>
    %205 = arith.addf %193, %204 : vector<8x128xf32>
    %c17 = arith.constant 17 : index
    %206 = memref.load %arg1[%c17] : memref<20xf32, #tpu.memory_space<smem>>
    %207 = vector.broadcast %206 : f32 to vector<8x128xf32>
    %208 = arith.mulf %0, %207 : vector<8x128xf32>
    %c17_53 = arith.constant 17 : index
    %209 = memref.load %arg2[%c17_53] : memref<20xf32, #tpu.memory_space<smem>>
    %210 = vector.broadcast %209 : f32 to vector<8x128xf32>
    %211 = arith.addf %208, %210 : vector<8x128xf32>
    %cst_54 = arith.constant 0.000000e+00 : f32
    %212 = vector.broadcast %cst_54 : f32 to vector<8x128xf32>
    %213 = arith.maximumf %211, %212 : vector<8x128xf32>
    %c17_55 = arith.constant 17 : index
    %214 = memref.load %arg3[%c17_55] : memref<20xf32, #tpu.memory_space<smem>>
    %215 = vector.broadcast %214 : f32 to vector<8x128xf32>
    %216 = arith.mulf %213, %215 : vector<8x128xf32>
    %217 = arith.addf %205, %216 : vector<8x128xf32>
    %c18 = arith.constant 18 : index
    %218 = memref.load %arg1[%c18] : memref<20xf32, #tpu.memory_space<smem>>
    %219 = vector.broadcast %218 : f32 to vector<8x128xf32>
    %220 = arith.mulf %0, %219 : vector<8x128xf32>
    %c18_56 = arith.constant 18 : index
    %221 = memref.load %arg2[%c18_56] : memref<20xf32, #tpu.memory_space<smem>>
    %222 = vector.broadcast %221 : f32 to vector<8x128xf32>
    %223 = arith.addf %220, %222 : vector<8x128xf32>
    %cst_57 = arith.constant 0.000000e+00 : f32
    %224 = vector.broadcast %cst_57 : f32 to vector<8x128xf32>
    %225 = arith.maximumf %223, %224 : vector<8x128xf32>
    %c18_58 = arith.constant 18 : index
    %226 = memref.load %arg3[%c18_58] : memref<20xf32, #tpu.memory_space<smem>>
    %227 = vector.broadcast %226 : f32 to vector<8x128xf32>
    %228 = arith.mulf %225, %227 : vector<8x128xf32>
    %229 = arith.addf %217, %228 : vector<8x128xf32>
    %c19 = arith.constant 19 : index
    %230 = memref.load %arg1[%c19] : memref<20xf32, #tpu.memory_space<smem>>
    %231 = vector.broadcast %230 : f32 to vector<8x128xf32>
    %232 = arith.mulf %0, %231 : vector<8x128xf32>
    %c19_59 = arith.constant 19 : index
    %233 = memref.load %arg2[%c19_59] : memref<20xf32, #tpu.memory_space<smem>>
    %234 = vector.broadcast %233 : f32 to vector<8x128xf32>
    %235 = arith.addf %232, %234 : vector<8x128xf32>
    %cst_60 = arith.constant 0.000000e+00 : f32
    %236 = vector.broadcast %cst_60 : f32 to vector<8x128xf32>
    %237 = arith.maximumf %235, %236 : vector<8x128xf32>
    %c19_61 = arith.constant 19 : index
    %238 = memref.load %arg3[%c19_61] : memref<20xf32, #tpu.memory_space<smem>>
    %239 = vector.broadcast %238 : f32 to vector<8x128xf32>
    %240 = arith.mulf %237, %239 : vector<8x128xf32>
    %241 = arith.addf %229, %240 : vector<8x128xf32>
    %c0_62 = arith.constant 0 : index
    %242 = memref.load %arg4[%c0_62] : memref<1xf32, #tpu.memory_space<smem>>
    %243 = vector.broadcast %242 : f32 to vector<8x128xf32>
    %244 = arith.addf %241, %243 : vector<8x128xf32>
    %c0_63 = arith.constant 0 : index
    %c0_64 = arith.constant 0 : index
    %245 = vector.load %arg6[%c0_63, %c0_64] : memref<8x128xf32, #tpu.memory_space<vmem>>, vector<8x128xf32>
    tpu.vector_store %arg6[%c0_63, %c0_64], %244 {strides = array<i32>} : memref<8x128xf32, #tpu.memory_space<vmem>>, vector<8x128xf32>,
    return
  }
  func.func @transform_0(%arg0: i32, %arg1: memref<20xf32, #tpu.memory_space<smem>>, %arg2: memref<20xf32, #tpu.memory_space<smem>>, %arg3: memref<20xf32, #tpu.memory_space<smem>>, %arg4: memref<1xf32, #tpu.memory_space<smem>>) -> (i32, i32) {
    %c0_i32 = arith.constant 0 : i32
    %c0_i32_0 = arith.constant 0 : i32
    return %arg0, %c0_i32 : i32, i32
  }
  func.func @transform_1(%arg0: i32, %arg1: memref<20xf32, #tpu.memory_space<smem>>, %arg2: memref<20xf32, #tpu.memory_space<smem>>, %arg3: memref<20xf32, #tpu.memory_space<smem>>, %arg4: memref<1xf32, #tpu.memory_space<smem>>) -> (i32, i32) {
    %c0_i32 = arith.constant 0 : i32
    %c0_i32_0 = arith.constant 0 : i32
    return %arg0, %c0_i32 : i32, i32
  }
}

</mosaic_0001>

<llo_original>
// kernel: net_forward.1
$region0: #{net_forward.1}
  #allocation0 [shape = 'u32[]', space=smem, size = 0x4, offset = 0x4, fixed_abs, tag = 'smem constant byte address 0x4 - core index']
  #allocation1 [shape = 'u32[72,128]{1,0:T(1,128)}', space=vmem, size = 0x9000, scoped, tag = 'internal scratch']
  #allocation2 [shape = 's32[1]{0}', space=sflag, size = 0x4, scoped, tag = 'scoped memory for net_forward.1']
  #allocation3 [shape = 'u8[512]{0}', space=smem, size = 0x200, scoped, tag = 'prefetched SMEM operand 0']
  #allocation4 [shape = 'u8[512]{0}', space=smem, size = 0x200, scoped, tag = 'prefetched SMEM operand 1']
  #allocation5 [shape = 'u8[512]{0}', space=smem, size = 0x200, scoped, tag = 'prefetched SMEM operand 2']
  #allocation6 [shape = 'f32[1]{0:T(128)S(6)}', space=smem, size = 0x200, scoped, tag = 'prefetched SMEM operand 3']
  %s0 = inlined_call_operand.vmem [shape: f32[20], index: 0, kind: input, shape index: {}]
  %s1 = inlined_call_operand.vmem [shape: f32[20], index: 1, kind: input, shape index: {}]
  %s2 = inlined_call_operand.vmem [shape: f32[20], index: 2, kind: input, shape index: {}]
  %s3 = inlined_call_operand.<no memory space> [shape: f32[1], index: 3, kind: input, shape index: {}]
  %s4 = inlined_call_operand.vmem [shape: f32[8,128], index: 4, kind: input, shape index: {}]
  %s5 = inlined_call_operand.hbm [shape: f32[8,128], index: 5, kind: output, shape index: {}]
  %s6 = sld [smem:[#allocation0]]
  $region14: #{net_forward.1} parent=0
    _
  %s8 = ssub.s32 1, %s6
  %s9 = scalar_select 0, %s8, %s6
  %s11 = sshll.u32 %s0, 4
  %s12 = int_to_ptr.vmem [resolvable:$true] %s11
  %14 = dma.vmem_to_smem %s12, 16, [#allocation3], [#allocation2]
  %s16 = sshll.u32 %s1, 4
  %s17 = int_to_ptr.vmem [resolvable:$true] %s16
  %19 = dma.vmem_to_smem %s17, 16, [#allocation4], [#allocation2]
  %s21 = sshll.u32 %s2, 4
  %s22 = int_to_ptr.vmem [resolvable:$true] %s21
  %24 = dma.vmem_to_smem %s22, 16, [#allocation5], [#allocation2]
  %25 = sst [smem:[#allocation6]] %s3
  %27 = dma.done [#allocation2], 48
  %28 = sfence
  $region1: #{net_forward.1} parent=0
    #allocation7 [shape = 'u8[4096]{0}', space=vmem, size = 0x1000, scoped, tag = 'output window, operand 0, single buffered']
    #allocation8 [shape = 's32[1]{0}', space=sflag, size = 0x4, scoped, tag = 'scoped memory for net_forward.1']
    %29 = vsyncpa [#allocation8], 0
    // Predicated region
    $region2: #{net_forward.1} parent=1 // pred_check
      _
    $region3: #{net_forward.1} parent=1 // pred_check_branch
      %31 = sbr.rel (0) target = $region5
    $region4: #{net_forward.1} parent=1 // pred_region
      _
    $region5: #{net_forward.1} parent=1 // pred_fallthru
      _
    %v32 = vld [vmem:[%s4] sm:$0xff]
    %s33 = sld [smem:[#allocation3]]
    %v34 = vstv %s33
    %v35 = vmul.f32 %v32, %v34
    %s36 = sld [smem:[#allocation4]]
    %v37 = vstv %s36
    %v38 = vadd.f32 %v35, %v37
    %v39 = vmax.f32 %v38, 0.0
    %s40 = sld [smem:[#allocation5]]
    %v41 = vstv %s40
    %v42 = vmul.f32 %v39, %v41
    %v43 = vadd.f32 %v42, 0.0
    %s44 = sld [smem:[#allocation3 + $0x1]]
    %v45 = vstv %s44
    %v46 = vmul.f32 %v32, %v45
    %s47 = sld [smem:[#allocation4 + $0x1]]
    %v48 = vstv %s47
    %v49 = vadd.f32 %v46, %v48
    %v50 = vmax.f32 %v49, 0.0
    %s51 = sld [smem:[#allocation5 + $0x1]]
    %v52 = vstv %s51
    %v53 = vmul.f32 %v50, %v52
    %v54 = vadd.f32 %v43, %v53
    %s55 = sld [smem:[#allocation3 + $0x2]]
    %v56 = vstv %s55
    %v57 = vmul.f32 %v32, %v56
    %s58 = sld [smem:[#allocation4 + $0x2]]
    %v59 = vstv %s58
    %v60 = vadd.f32 %v57, %v59
    %v61 = vmax.f32 %v60, 0.0
    %s62 = sld [smem:[#allocation5 + $0x2]]
    %v63 = vstv %s62
    %v64 = vmul.f32 %v61, %v63
    %v65 = vadd.f32 %v54, %v64
    %s66 = sld [smem:[#allocation3 + $0x3]]
    %v67 = vstv %s66
    %v68 = vmul.f32 %v32, %v67
    %s69 = sld [smem:[#allocation4 + $0x3]]
    %v70 = vstv %s69
    %v71 = vadd.f32 %v68, %v70
    %v72 = vmax.f32 %v71, 0.0
    %s73 = sld [smem:[#allocation5 + $0x3]]
    %v74 = vstv %s73
    %v75 = vmul.f32 %v72, %v74
    %v76 = vadd.f32 %v65, %v75
    %s77 = sld [smem:[#allocation3 + $0x4]]
    %v78 = vstv %s77
    %v79 = vmul.f32 %v32, %v78
    %s80 = sld [smem:[#allocation4 + $0x4]]
    %v81 = vstv %s80
    %v82 = vadd.f32 %v79, %v81
    %v83 = vmax.f32 %v82, 0.0
    %s84 = sld [smem:[#allocation5 + $0x4]]
    %v85 = vstv %s84
    %v86 = vmul.f32 %v83, %v85
    %v87 = vadd.f32 %v76, %v86
    %s88 = sld [smem:[#allocation3 + $0x5]]
    %v89 = vstv %s88
    %v90 = vmul.f32 %v32, %v89
    %s91 = sld [smem:[#allocation4 + $0x5]]
    %v92 = vstv %s91
    %v93 = vadd.f32 %v90, %v92
    %v94 = vmax.f32 %v93, 0.0
    %s95 = sld [smem:[#allocation5 + $0x5]]
    %v96 = vstv %s95
    %v97 = vmul.f32 %v94, %v96
    %v98 = vadd.f32 %v87, %v97
    %s99 = sld [smem:[#allocation3 + $0x6]]
    %v100 = vstv %s99
    %v101 = vmul.f32 %v32, %v100
    %s102 = sld [smem:[#allocation4 + $0x6]]
    %v103 = vstv %s102
    %v104 = vadd.f32 %v101, %v103
    %v105 = vmax.f32 %v104, 0.0
    %s106 = sld [smem:[#allocation5 + $0x6]]
    %v107 = vstv %s106
    %v108 = vmul.f32 %v105, %v107
    %v109 = vadd.f32 %v98, %v108
    %s110 = sld [smem:[#allocation3 + $0x7]]
    %v111 = vstv %s110
    %v112 = vmul.f32 %v32, %v111
    %s113 = sld [smem:[#allocation4 + $0x7]]
    %v114 = vstv %s113
    %v115 = vadd.f32 %v112, %v114
    %v116 = vmax.f32 %v115, 0.0
    %s117 = sld [smem:[#allocation5 + $0x7]]
    %v118 = vstv %s117
    %v119 = vmul.f32 %v116, %v118
    %v120 = vadd.f32 %v109, %v119
    %s121 = sld [smem:[#allocation3 + $0x8]]
    %v122 = vstv %s121
    %v123 = vmul.f32 %v32, %v122
    %s124 = sld [smem:[#allocation4 + $0x8]]
    %v125 = vstv %s124
    %v126 = vadd.f32 %v123, %v125
    %v127 = vmax.f32 %v126, 0.0
    %s128 = sld [smem:[#allocation5 + $0x8]]
    %v129 = vstv %s128
    %v130 = vmul.f32 %v127, %v129
    %v131 = vadd.f32 %v120, %v130
    %s132 = sld [smem:[#allocation3 + $0x9]]
    %v133 = vstv %s132
    %v134 = vmul.f32 %v32, %v133
    %s135 = sld [smem:[#allocation4 + $0x9]]
    %v136 = vstv %s135
    %v137 = vadd.f32 %v134, %v136
    %v138 = vmax.f32 %v137, 0.0
    %s139 = sld [smem:[#allocation5 + $0x9]]
    %v140 = vstv %s139
    %v141 = vmul.f32 %v138, %v140
    %v142 = vadd.f32 %v131, %v141
    %s143 = sld [smem:[#allocation3 + $0xa]]
    %v144 = vstv %s143
    %v145 = vmul.f32 %v32, %v144
    %s146 = sld [smem:[#allocation4 + $0xa]]
    %v147 = vstv %s146
    %v148 = vadd.f32 %v145, %v147
    %v149 = vmax.f32 %v148, 0.0
    %s150 = sld [smem:[#allocation5 + $0xa]]
    %v151 = vstv %s150
    %v152 = vmul.f32 %v149, %v151
    %v153 = vadd.f32 %v142, %v152
    %s154 = sld [smem:[#allocation3 + $0xb]]
    %v155 = vstv %s154
    %v156 = vmul.f32 %v32, %v155
    %s157 = sld [smem:[#allocation4 + $0xb]]
    %v158 = vstv %s157
    %v159 = vadd.f32 %v156, %v158
    %v160 = vmax.f32 %v159, 0.0
    %s161 = sld [smem:[#allocation5 + $0xb]]
    %v162 = vstv %s161
    %v163 = vmul.f32 %v160, %v162
    %v164 = vadd.f32 %v153, %v163
    %s165 = sld [smem:[#allocation3 + $0xc]]
    %v166 = vstv %s165
    %v167 = vmul.f32 %v32, %v166
    %s168 = sld [smem:[#allocation4 + $0xc]]
    %v169 = vstv %s168
    %v170 = vadd.f32 %v167, %v169
    %v171 = vmax.f32 %v170, 0.0
    %s172 = sld [smem:[#allocation5 + $0xc]]
    %v173 = vstv %s172
    %v174 = vmul.f32 %v171, %v173
    %v175 = vadd.f32 %v164, %v174
    %s176 = sld [smem:[#allocation3 + $0xd]]
    %v177 = vstv %s176
    %v178 = vmul.f32 %v32, %v177
    %s179 = sld [smem:[#allocation4 + $0xd]]
    %v180 = vstv %s179
    %v181 = vadd.f32 %v178, %v180
    %v182 = vmax.f32 %v181, 0.0
    %s183 = sld [smem:[#allocation5 + $0xd]]
    %v184 = vstv %s183
    %v185 = vmul.f32 %v182, %v184
    %v186 = vadd.f32 %v175, %v185
    %s187 = sld [smem:[#allocation3 + $0xe]]
    %v188 = vstv %s187
    %v189 = vmul.f32 %v32, %v188
    %s190 = sld [smem:[#allocation4 + $0xe]]
    %v191 = vstv %s190
    %v192 = vadd.f32 %v189, %v191
    %v193 = vmax.f32 %v192, 0.0
    %s194 = sld [smem:[#allocation5 + $0xe]]
    %v195 = vstv %s194
    %v196 = vmul.f32 %v193, %v195
    %v197 = vadd.f32 %v186, %v196
    %s198 = sld [smem:[#allocation3 + $0xf]]
    %v199 = vstv %s198
    %v200 = vmul.f32 %v32, %v199
    %s201 = sld [smem:[#allocation4 + $0xf]]
    %v202 = vstv %s201
    %v203 = vadd.f32 %v200, %v202
    %v204 = vmax.f32 %v203, 0.0
    %s205 = sld [smem:[#allocation5 + $0xf]]
    %v206 = vstv %s205
    %v207 = vmul.f32 %v204, %v206
    %v208 = vadd.f32 %v197, %v207
    %s209 = sld [smem:[#allocation3 + $0x10]]
    %v210 = vstv %s209
    %v211 = vmul.f32 %v32, %v210
    %s212 = sld [smem:[#allocation4 + $0x10]]
    %v213 = vstv %s212
    %v214 = vadd.f32 %v211, %v213
    %v215 = vmax.f32 %v214, 0.0
    %s216 = sld [smem:[#allocation5 + $0x10]]
    %v217 = vstv %s216
    %v218 = vmul.f32 %v215, %v217
    %v219 = vadd.f32 %v208, %v218
    %s220 = sld [smem:[#allocation3 + $0x11]]
    %v221 = vstv %s220
    %v222 = vmul.f32 %v32, %v221
    %s223 = sld [smem:[#allocation4 + $0x11]]
    %v224 = vstv %s223
    %v225 = vadd.f32 %v222, %v224
    %v226 = vmax.f32 %v225, 0.0
    %s227 = sld [smem:[#allocation5 + $0x11]]
    %v228 = vstv %s227
    %v229 = vmul.f32 %v226, %v228
    %v230 = vadd.f32 %v219, %v229
    %s231 = sld [smem:[#allocation3 + $0x12]]
    %v232 = vstv %s231
    %v233 = vmul.f32 %v32, %v232
    %s234 = sld [smem:[#allocation4 + $0x12]]
    %v235 = vstv %s234
    %v236 = vadd.f32 %v233, %v235
    %v237 = vmax.f32 %v236, 0.0
    %s238 = sld [smem:[#allocation5 + $0x12]]
    %v239 = vstv %s238
    %v240 = vmul.f32 %v237, %v239
    %v241 = vadd.f32 %v230, %v240
    %s242 = sld [smem:[#allocation3 + $0x13]]
    %v243 = vstv %s242
    %v244 = vmul.f32 %v32, %v243
    %s245 = sld [smem:[#allocation4 + $0x13]]
    %v246 = vstv %s245
    %v247 = vadd.f32 %v244, %v246
    %v248 = vmax.f32 %v247, 0.0
    %s249 = sld [smem:[#allocation5 + $0x13]]
    %v250 = vstv %s249
    %v251 = vmul.f32 %v248, %v250
    %v252 = vadd.f32 %v241, %v251
    %s253 = sld [smem:[#allocation6]]
    %v254 = vstv %s253
    %v255 = vadd.f32 %v252, %v254
    %256 = vst [vmem:[#allocation7] sm:$0xff] %v255
    // Predicated region
    $region6: #{net_forward.1} parent=1 // pred_check
      _
    $region7: #{net_forward.1} parent=1 // pred_check_branch
      %258 = sbr.rel (0) target = $region9
    $region8: #{net_forward.1} parent=1 // pred_region
      %260 = vsyncadd [#allocation8], 0
      %s262 = sshll.u32 [#allocation7], 4
      %s263 = int_to_ptr.vmem [resolvable:$true] %s262
      %s264 = sshll.u32 %s5, 4
      %s265 = int_to_ptr.hbm [resolvable:$true] %s264
      %267 = dma.vmem_to_hbm [thread:$0]  %s263, 128, %s265, [#allocation8]
    $region9: #{net_forward.1} parent=1 // pred_fallthru
      _
    // Predicated region
    $region10: #{net_forward.1} parent=1 // pred_check
      _
    $region11: #{net_forward.1} parent=1 // pred_check_branch
      %269 = sbr.rel (0) target = $region13
    $region12: #{net_forward.1} parent=1 // pred_region
      %271 = dma.done [#allocation8], 128
    $region13: #{net_forward.1} parent=1 // pred_fallthru
      _
    %272 = vsyncpa [#allocation8], 1

</llo_original>
